<compile_context>
chip_gen: v6e
topology: v6e:2x2x1
jax: 0.10.0
libtpu: 0.0.40
codegen_flags: <defaults>
</compile_context>

<pallas_src>
import functools

import jax
import jax.numpy as jnp
from jax.experimental import pallas as pl
from jax.experimental.pallas import tpu as pltpu

TM_MAX = 512          # row tile for large layers (mem-bound sweet spot, weights stay resident)
LRELU_SLOPE = 0.2
BN_EPS = 1e-5


# --------------------------- Pallas kernel ----------------------------------

def _conv_layer_kernel(a_ref, w_ref, b_ref, sc_ref, sh_ref, o_ref, *stat_refs,
                       lrelu_in, tm, m_total, need_mask):
    """Fused layer: input transform (previous layer's BN affine + LeakyReLU) applied to the
    A tile -> bf16 matmul with f32 accumulation -> bias -> store raw output -> optional
    per-tile partial per-channel sum / sum-of-squares of the output (for this layer's BN)."""
    a = a_ref[...].astype(jnp.float32)
    a = a * sc_ref[...] + sh_ref[...]                 # previous layer's BN (or identity)
    if lrelu_in:
        a = jnp.where(a >= 0, a, LRELU_SLOPE * a)     # previous layer's LeakyReLU(0.2)

    y = jnp.dot(a.astype(jnp.bfloat16), w_ref[...],
                preferred_element_type=jnp.float32)
    y = y + b_ref[...]
    o_ref[...] = y.astype(o_ref.dtype)

    if stat_refs:                                     # this layer is followed by BatchNorm
        sum_ref, sq_ref = stat_refs
        if need_mask:                                 # partial last M tile: drop OOB rows
            rows = (pl.program_id(0) * tm
                    + jax.lax.broadcasted_iota(jnp.int32, (tm, 1), 0))
            y = jnp.where(rows < m_total, y, 0.0)
        sum_ref[...] = jnp.sum(y, axis=0, keepdims=True)[None]
        sq_ref[...] = jnp.sum(y * y, axis=0, keepdims=True)[None]


# --------------------------- kernel wrapper ----------------------------------

def conv_layer(patches, w_flat, bias, in_scale, in_shift, *,
               lrelu_in, want_stats, out_dtype):
    """patches (M, K) @ w_flat (K, Cout) + bias, with the previous layer's per-channel
    affine (scale/shift, tiled to K) and optional LeakyReLU fused on the input side, and
    this layer's BatchNorm partial statistics fused on the output side."""
    M, K = patches.shape
    Cout = w_flat.shape[1]
    tm = M if M <= TM_MAX else TM_MAX
    grid_g = pl.cdiv(M, tm)
    need_mask = (tm * grid_g != M)

    kernel = functools.partial(_conv_layer_kernel, lrelu_in=lrelu_in, tm=tm,
                               m_total=M, need_mask=need_mask)

    in_specs = [
        pl.BlockSpec((tm, K), lambda i: (i, 0)),
        pl.BlockSpec((K, Cout), lambda i: (0, 0)),    # weight block resident across M grid
        pl.BlockSpec((1, Cout), lambda i: (0, 0)),
        pl.BlockSpec((1, K), lambda i: (0, 0)),
        pl.BlockSpec((1, K), lambda i: (0, 0)),
    ]
    out_spec_y = pl.BlockSpec((tm, Cout), lambda i: (i, 0))

    if want_stats:
        out_shape = (
            jax.ShapeDtypeStruct((M, Cout), out_dtype),
            jax.ShapeDtypeStruct((grid_g, 1, Cout), jnp.float32),
            jax.ShapeDtypeStruct((grid_g, 1, Cout), jnp.float32),
        )
        out_specs = (
            out_spec_y,
            pl.BlockSpec((1, 1, Cout), lambda i: (i, 0, 0)),
            pl.BlockSpec((1, 1, Cout), lambda i: (i, 0, 0)),
        )
    else:
        out_shape = jax.ShapeDtypeStruct((M, Cout), out_dtype)
        out_specs = out_spec_y

    result = pl.pallas_call(
        kernel,
        out_shape=out_shape,
        grid_spec=pltpu.PrefetchScalarGridSpec(
            num_scalar_prefetch=0,
            grid=(grid_g,),
            in_specs=in_specs,
            out_specs=out_specs,
        ),
        compiler_params=pltpu.CompilerParams(dimension_semantics=("parallel",)),
    )(
        patches.astype(jnp.bfloat16),
        w_flat.astype(jnp.bfloat16),
        bias.reshape(1, Cout).astype(jnp.float32),
        in_scale.reshape(1, K).astype(jnp.float32),
        in_shift.reshape(1, K).astype(jnp.float32),
    )

    if want_stats:
        y, s, sq = result
        return y, jnp.sum(s, axis=(0, 1)), jnp.sum(sq, axis=(0, 1))
    return result


# --------------------------- model glue --------------------------------------

def _im2col(x, kh, kw, stride):
    """x: (N, H, W, C) NHWC -> ((N*OH*OW, KH*KW*C), N, OH, OW). Valid padding (padw=0)."""
    N, H, W, C = x.shape
    OH = (H - kh) // stride + 1
    OW = (W - kw) // stride + 1
    cols = []
    for i in range(kh):
        for j in range(kw):
            cols.append(
                x[:, i:i + stride * (OH - 1) + 1:stride,
                     j:j + stride * (OW - 1) + 1:stride, :]
            )
    p = jnp.stack(cols, axis=3)                      # (N, OH, OW, KH*KW, C)
    return p.reshape(N * OH * OW, kh * kw * C), N, OH, OW


def init_params(key, input_nc, ndf, n_layers):
    """Deterministic synthetic parameters matching the torch module's layer shapes."""
    # layer spec: (cin, cout, kernel, stride, use_bias, use_bn, lrelu) — padw = 0 everywhere.
    specs = [(input_nc, ndf, 4, 2, True, False, True)]
    nf_mult = 1
    for n in range(1, n_layers):
        nf_prev, nf_mult = nf_mult, min(2 ** n, 8)
        specs.append((ndf * nf_prev, ndf * nf_mult, 4, 2, False, True, True))
    nf_prev, nf_mult = nf_mult, min(2 ** n_layers, 8)
    specs.append((ndf * nf_prev, ndf * nf_mult, 4, 1, False, True, True))
    specs.append((ndf * nf_mult, 1, 3, 1, True, False, False))   # final conv, no activation

    params = []
    for (cin, cout, k, stride, use_bias, use_bn, lrelu) in specs:
        key, kw_, kb_ = jax.random.split(key, 3)
        w = jax.random.normal(kw_, (cout, cin, k, k), jnp.float32) * 0.05  # torch OIHW
        b = (jax.random.normal(kb_, (cout,), jnp.float32) * 0.05
             if use_bias else jnp.zeros((cout,), jnp.float32))
        params.append(dict(
            w=w, b=b,
            gamma=jnp.ones((cout,), jnp.float32),     # BatchNorm2d default affine init
            beta=jnp.zeros((cout,), jnp.float32),
            k=k, stride=stride, use_bn=use_bn, lrelu=lrelu,
        ))
    return params


def nlayer_discriminator_forward(x_nchw, params):
    """Forward pass.  Inter-layer activations are the *raw* (pre-norm, pre-activation)
    conv outputs in bf16; each layer's kernel applies the previous layer's BN + LeakyReLU
    to its input tile, so normalization/activation never takes an extra HBM pass."""
    x = jnp.transpose(x_nchw, (0, 2, 3, 1)).astype(jnp.bfloat16)   # NCHW -> NHWC, bf16
    in_scale_c = jnp.ones((x.shape[-1],), jnp.float32)             # pending input transform
    in_shift_c = jnp.zeros((x.shape[-1],), jnp.float32)
    lrelu_in = False
    n_total = len(params)

    for li, p in enumerate(params):
        k, stride = p["k"], p["stride"]
        cout, cin = p["w"].shape[0], p["w"].shape[1]
        patches, N, OH, OW = _im2col(x, k, k, stride)
        K = k * k * cin
        # OIHW -> (KH, KW, Cin, Cout) -> (KH*KW*Cin, Cout) to match patch ordering.
        w_flat = jnp.transpose(p["w"], (2, 3, 1, 0)).reshape(K, cout)
        # Tile the pending per-channel affine across the kh*kw taps (channel-minor layout).
        scale_K = jnp.tile(in_scale_c, k * k)
        shift_K = jnp.tile(in_shift_c, k * k)
        is_last = li == n_total - 1

        if p["use_bn"]:
            y, s, sq = conv_layer(patches, w_flat, p["b"], scale_K, shift_K,
                                  lrelu_in=lrelu_in, want_stats=True,
                                  out_dtype=jnp.bfloat16)
            M = patches.shape[0]                       # = N*OH*OW, BatchNorm2d reduction size
            mean = s / M
            var = sq / M - mean * mean                 # biased variance (train-mode BN)
            inv = jax.lax.rsqrt(var + BN_EPS)
            in_scale_c = p["gamma"] * inv              # fold BN into next layer's input tf
            in_shift_c = p["beta"] - mean * in_scale_c
            lrelu_in = True                            # BN layers are followed by LeakyReLU
        else:
            y = conv_layer(patches, w_flat, p["b"], scale_K, shift_K,
                           lrelu_in=lrelu_in, want_stats=False,
                           out_dtype=jnp.float32 if is_last else jnp.bfloat16)
            in_scale_c = jnp.ones((cout,), jnp.float32)
            in_shift_c = jnp.zeros((cout,), jnp.float32)
            lrelu_in = p["lrelu"]                      # layer 0: defer its LeakyReLU

        x = y.reshape(N, OH, OW, cout)

    return jnp.transpose(x, (0, 3, 1, 2)).astype(jnp.float32)      # NHWC -> NCHW


if __name__ == "__main__":
    # Small-but-valid config: input_nc=4, ndf=8, n_layers=2, 32x32 input.
    # Layer chain: conv(4->8,k4,s2)+lrelu -> conv(8->16,k4,s2)+BN+lrelu
    #            -> conv(16->32,k4,s1)+BN+lrelu -> conv(32->1,k3,s1)
    # Spatial (padw=0): 32 -> 15 -> 6 -> 3 -> 1, so output is (2, 1, 1, 1) NCHW.
    key = jax.random.PRNGKey(0)
    kx, kp = jax.random.split(key)
    input_nc, ndf, n_layers = 4, 8, 2
    x = jax.random.normal(kx, (2, input_nc, 32, 32), jnp.float32)

    params = init_params(kp, input_nc, ndf, n_layers)
    out = nlayer_discriminator_forward(x, params)
    out = jax.block_until_ready(out)

    assert out.shape == (2, 1, 1, 1), out.shape
    assert jnp.all(jnp.isfinite(out))
    print("KERNEL_OK")
</pallas_src>

<mosaic_0001>
module attributes {stable_mosaic.version = 11 : i64} {
  func.func @_conv_layer_kernel(%arg0: i32, %arg1: memref<450x64xbf16, #tpu.memory_space<vmem>>, %arg2: memref<64x8xbf16, #tpu.memory_space<vmem>>, %arg3: memref<1x8xf32, #tpu.memory_space<vmem>>, %arg4: memref<1x64xf32, #tpu.memory_space<vmem>>, %arg5: memref<1x64xf32, #tpu.memory_space<vmem>>, %arg6: memref<450x8xbf16, #tpu.memory_space<vmem>>) attributes {dimension_semantics = [#tpu.dimension_semantics<parallel>], iteration_bounds = array<i64: 1>, scalar_prefetch = 0 : i64, scratch_operands = 0 : i64, tpu.core_type = #tpu.core_type<tc>, window_params = [{transform_indices = @transform_0, window_bounds = array<i64: 450, 64>}, {pipeline_mode = #tpu.pipeline_mode<synchronous>, transform_indices = @transform_1, window_bounds = array<i64: 64, 8>}, {pipeline_mode = #tpu.pipeline_mode<synchronous>, transform_indices = @transform_2, window_bounds = array<i64: 1, 8>}, {pipeline_mode = #tpu.pipeline_mode<synchronous>, transform_indices = @transform_3, window_bounds = array<i64: 1, 64>}, {pipeline_mode = #tpu.pipeline_mode<synchronous>, transform_indices = @transform_4, window_bounds = array<i64: 1, 64>}, {transform_indices = @transform_5, window_bounds = array<i64: 450, 8>}]} {
    %c0 = arith.constant 0 : index
    %c0_0 = arith.constant 0 : index
    %0 = vector.load %arg1[%c0, %c0_0] : memref<450x64xbf16, #tpu.memory_space<vmem>>, vector<450x64xbf16>
    %1 = arith.extf %0 : vector<450x64xbf16> to vector<450x64xf32>
    %c0_1 = arith.constant 0 : index
    %c0_2 = arith.constant 0 : index
    %2 = vector.load %arg4[%c0_1, %c0_2] : memref<1x64xf32, #tpu.memory_space<vmem>>, vector<1x64xf32>
    %3 = vector.broadcast %2 : vector<1x64xf32> to vector<450x64xf32>
    %4 = arith.mulf %1, %3 : vector<450x64xf32>
    %c0_3 = arith.constant 0 : index
    %c0_4 = arith.constant 0 : index
    %5 = vector.load %arg5[%c0_3, %c0_4] : memref<1x64xf32, #tpu.memory_space<vmem>>, vector<1x64xf32>
    %6 = vector.broadcast %5 : vector<1x64xf32> to vector<450x64xf32>
    %7 = arith.addf %4, %6 : vector<450x64xf32>
    %8 = arith.truncf %7 : vector<450x64xf32> to vector<450x64xbf16>
    %c0_5 = arith.constant 0 : index
    %c0_6 = arith.constant 0 : index
    %9 = vector.load %arg2[%c0_5, %c0_6] : memref<64x8xbf16, #tpu.memory_space<vmem>>, vector<64x8xbf16>
    %cst = arith.constant dense<0.000000e+00> : vector<450x8xf32>
    %10 = tpu.matmul %8, %9, %cst {dimension_numbers = #tpu.dot_dimension_numbers<[1], [0], [0], [1], [0, 0, 1, 1], [], []>} : vector<450x64xbf16>, vector<64x8xbf16>, vector<450x8xf32> -> vector<450x8xf32>
    %c0_7 = arith.constant 0 : index
    %c0_8 = arith.constant 0 : index
    %11 = vector.load %arg3[%c0_7, %c0_8] : memref<1x8xf32, #tpu.memory_space<vmem>>, vector<1x8xf32>
    %12 = vector.broadcast %11 : vector<1x8xf32> to vector<450x8xf32>
    %13 = arith.addf %10, %12 : vector<450x8xf32>
    %14 = arith.truncf %13 : vector<450x8xf32> to vector<450x8xbf16>
    %c0_9 = arith.constant 0 : index
    %c0_10 = arith.constant 0 : index
    %15 = vector.load %arg6[%c0_9, %c0_10] : memref<450x8xbf16, #tpu.memory_space<vmem>>, vector<450x8xbf16>
    tpu.vector_store %arg6[%c0_9, %c0_10], %14 {strides = array<i32>} : memref<450x8xbf16, #tpu.memory_space<vmem>>, vector<450x8xbf16>,
    return
  }
  func.func @transform_0(%arg0: i32) -> (i32, i32) {
    %c0_i32 = arith.constant 0 : i32
    %c0_i32_0 = arith.constant 0 : i32
    return %arg0, %c0_i32 : i32, i32
  }
  func.func @transform_1(%arg0: i32) -> (i32, i32) {
    %c0_i32 = arith.constant 0 : i32
    %c0_i32_0 = arith.constant 0 : i32
    %c0_i32_1 = arith.constant 0 : i32
    return %c0_i32, %c0_i32_0 : i32, i32
  }
  func.func @transform_2(%arg0: i32) -> (i32, i32) {
    %c0_i32 = arith.constant 0 : i32
    %c0_i32_0 = arith.constant 0 : i32
    %c0_i32_1 = arith.constant 0 : i32
    return %c0_i32, %c0_i32_0 : i32, i32
  }
  func.func @transform_3(%arg0: i32) -> (i32, i32) {
    %c0_i32 = arith.constant 0 : i32
    %c0_i32_0 = arith.constant 0 : i32
    %c0_i32_1 = arith.constant 0 : i32
    return %c0_i32, %c0_i32_0 : i32, i32
  }
  func.func @transform_4(%arg0: i32) -> (i32, i32) {
    %c0_i32 = arith.constant 0 : i32
    %c0_i32_0 = arith.constant 0 : i32
    %c0_i32_1 = arith.constant 0 : i32
    return %c0_i32, %c0_i32_0 : i32, i32
  }
  func.func @transform_5(%arg0: i32) -> (i32, i32) {
    %c0_i32 = arith.constant 0 : i32
    %c0_i32_0 = arith.constant 0 : i32
    return %arg0, %c0_i32 : i32, i32
  }
}

</mosaic_0001>

<llo_original>
// kernel: tpu_custom_call.1
$region0: #{tpu_custom_call.1}
  #allocation0 [shape = 'u32[]', space=smem, size = 0x4, offset = 0x4, fixed_abs, tag = 'smem constant byte address 0x4 - core index']
  #allocation1 [shape = 'u32[144,128]{1,0:T(1,128)}', space=vmem, size = 0x12000, scoped, tag = 'internal scratch']
  %s0 = inlined_call_operand.vmem [shape: bf16[450,64], index: 0, kind: input, shape index: {}]
  %s1 = inlined_call_operand.vmem [shape: bf16[64,8], index: 1, kind: input, shape index: {}]
  %s2 = inlined_call_operand.vmem [shape: f32[1,8], index: 2, kind: input, shape index: {}]
  %s3 = inlined_call_operand.vmem [shape: f32[1,64], index: 3, kind: input, shape index: {}]
  %s4 = inlined_call_operand.vmem [shape: f32[1,64], index: 4, kind: input, shape index: {}]
  %s5 = inlined_call_operand.vmem [shape: bf16[450,8], index: 5, kind: output, shape index: {}]
  %s6 = sld [smem:[#allocation0]]
  $region30: #{tpu_custom_call.1} parent=0
    _
  %s8 = ssub.s32 1, %s6
  %s9 = scalar_select 0, %s8, %s6
  // Predicated region
  $region2: #{tpu_custom_call.1} parent=0 // pred_check
    _
  $region3: #{tpu_custom_call.1} parent=0 // pred_check_branch
    %11 = sbr.rel (0) target = $region5
  $region4: #{tpu_custom_call.1} parent=0 // pred_region
    _
  $region5: #{tpu_custom_call.1} parent=0 // pred_fallthru
    _
  // Predicated region
  $region6: #{tpu_custom_call.1} parent=0 // pred_check
    _
  $region7: #{tpu_custom_call.1} parent=0 // pred_check_branch
    %13 = sbr.rel (0) target = $region9
  $region8: #{tpu_custom_call.1} parent=0 // pred_region
    _
  $region9: #{tpu_custom_call.1} parent=0 // pred_fallthru
    _
  // Predicated region
  $region10: #{tpu_custom_call.1} parent=0 // pred_check
    _
  $region11: #{tpu_custom_call.1} parent=0 // pred_check_branch
    %15 = sbr.rel (0) target = $region13
  $region12: #{tpu_custom_call.1} parent=0 // pred_region
    _
  $region13: #{tpu_custom_call.1} parent=0 // pred_fallthru
    _
  // Predicated region
  $region14: #{tpu_custom_call.1} parent=0 // pred_check
    _
  $region15: #{tpu_custom_call.1} parent=0 // pred_check_branch
    %17 = sbr.rel (0) target = $region17
  $region16: #{tpu_custom_call.1} parent=0 // pred_region
    _
  $region17: #{tpu_custom_call.1} parent=0 // pred_fallthru
    _
  // Predicated region
  $region18: #{tpu_custom_call.1} parent=0 // pred_check
    _
  $region19: #{tpu_custom_call.1} parent=0 // pred_check_branch
    %19 = sbr.rel (0) target = $region21
  $region20: #{tpu_custom_call.1} parent=0 // pred_region
    _
  $region21: #{tpu_custom_call.1} parent=0 // pred_fallthru
    _
  %v21 = vld [vmem:[%s0] sm:$0xf]
  %v22 = vld [vmem:[%s0 + $0x4] sm:$0xf]
  %v23 = vld [vmem:[%s0 + $0x8] sm:$0xf]
  %v24 = vld [vmem:[%s0 + $0xc] sm:$0xf]
  %v25 = vld [vmem:[%s0 + $0x10] sm:$0xf]
  %v26 = vld [vmem:[%s0 + $0x14] sm:$0xf]
  %v27 = vld [vmem:[%s0 + $0x18] sm:$0xf]
  %v28 = vld [vmem:[%s0 + $0x1c] sm:$0xf]
  %v29 = vld [vmem:[%s0 + $0x20] sm:$0xf]
  %v30 = vld [vmem:[%s0 + $0x24] sm:$0xf]
  %v31 = vld [vmem:[%s0 + $0x28] sm:$0xf]
  %v32 = vld [vmem:[%s0 + $0x2c] sm:$0xf]
  %v33 = vld [vmem:[%s0 + $0x30] sm:$0xf]
  %v34 = vld [vmem:[%s0 + $0x34] sm:$0xf]
  %v35 = vld [vmem:[%s0 + $0x38] sm:$0xf]
  %v36 = vld [vmem:[%s0 + $0x3c] sm:$0xf]
  %v37 = vld [vmem:[%s0 + $0x40] sm:$0xf]
  %v38 = vld [vmem:[%s0 + $0x44] sm:$0xf]
  %v39 = vld [vmem:[%s0 + $0x48] sm:$0xf]
  %v40 = vld [vmem:[%s0 + $0x4c] sm:$0xf]
  %v41 = vld [vmem:[%s0 + $0x50] sm:$0xf]
  %v42 = vld [vmem:[%s0 + $0x54] sm:$0xf]
  %v43 = vld [vmem:[%s0 + $0x58] sm:$0xf]
  %v44 = vld [vmem:[%s0 + $0x5c] sm:$0xf]
  %v45 = vld [vmem:[%s0 + $0x60] sm:$0xf]
  %v46 = vld [vmem:[%s0 + $0x64] sm:$0xf]
  %v47 = vld [vmem:[%s0 + $0x68] sm:$0xf]
  %v48 = vld [vmem:[%s0 + $0x6c] sm:$0xf]
  %v49 = vld [vmem:[%s0 + $0x70] sm:$0xf]
  %v50 = vld [vmem:[%s0 + $0x74] sm:$0xf]
  %v51 = vld [vmem:[%s0 + $0x78] sm:$0xf]
  %v52 = vld [vmem:[%s0 + $0x7c] sm:$0xf]
  %v53 = vld [vmem:[%s0 + $0x80] sm:$0xf]
  %v54 = vld [vmem:[%s0 + $0x84] sm:$0xf]
  %v55 = vld [vmem:[%s0 + $0x88] sm:$0xf]
  %v56 = vld [vmem:[%s0 + $0x8c] sm:$0xf]
  %v57 = vld [vmem:[%s0 + $0x90] sm:$0xf]
  %v58 = vld [vmem:[%s0 + $0x94] sm:$0xf]
  %v59 = vld [vmem:[%s0 + $0x98] sm:$0xf]
  %v60 = vld [vmem:[%s0 + $0x9c] sm:$0xf]
  %v61 = vld [vmem:[%s0 + $0xa0] sm:$0xf]
  %v62 = vld [vmem:[%s0 + $0xa4] sm:$0xf]
  %v63 = vld [vmem:[%s0 + $0xa8] sm:$0xf]
  %v64 = vld [vmem:[%s0 + $0xac] sm:$0xf]
  %v65 = vld [vmem:[%s0 + $0xb0] sm:$0xf]
  %v66 = vld [vmem:[%s0 + $0xb4] sm:$0xf]
  %v67 = vld [vmem:[%s0 + $0xb8] sm:$0xf]
  %v68 = vld [vmem:[%s0 + $0xbc] sm:$0xf]
  %v69 = vld [vmem:[%s0 + $0xc0] sm:$0xf]
  %v70 = vld [vmem:[%s0 + $0xc4] sm:$0xf]
  %v71 = vld [vmem:[%s0 + $0xc8] sm:$0xf]
  %v72 = vld [vmem:[%s0 + $0xcc] sm:$0xf]
  %v73 = vld [vmem:[%s0 + $0xd0] sm:$0xf]
  %v74 = vld [vmem:[%s0 + $0xd4] sm:$0xf]
  %v75 = vld [vmem:[%s0 + $0xd8] sm:$0xf]
  %v76 = vld [vmem:[%s0 + $0xdc] sm:$0xf]
  %v77 = vld [vmem:[%s0 + $0xe0] sm:$0x1]
  %v78 = vunpack.c.l.bf16 %v21
  %v79 = vunpack.c.l.bf16 %v22
  %v80 = vunpack.c.l.bf16 %v23
  %v81 = vunpack.c.l.bf16 %v24
  %v82 = vunpack.c.l.bf16 %v25
  %v83 = vunpack.c.l.bf16 %v26
  %v84 = vunpack.c.l.bf16 %v27
  %v85 = vunpack.c.l.bf16 %v28
  %v86 = vunpack.c.l.bf16 %v29
  %v87 = vunpack.c.l.bf16 %v30
  %v88 = vunpack.c.l.bf16 %v31
  %v89 = vunpack.c.l.bf16 %v32
  %v90 = vunpack.c.l.bf16 %v33
  %v91 = vunpack.c.l.bf16 %v34
  %v92 = vunpack.c.l.bf16 %v35
  %v93 = vunpack.c.l.bf16 %v36
  %v94 = vunpack.c.l.bf16 %v37
  %v95 = vunpack.c.l.bf16 %v38
  %v96 = vunpack.c.l.bf16 %v39
  %v97 = vunpack.c.l.bf16 %v40
  %v98 = vunpack.c.l.bf16 %v41
  %v99 = vunpack.c.l.bf16 %v42
  %v100 = vunpack.c.l.bf16 %v43
  %v101 = vunpack.c.l.bf16 %v44
  %v102 = vunpack.c.l.bf16 %v45
  %v103 = vunpack.c.l.bf16 %v46
  %v104 = vunpack.c.l.bf16 %v47
  %v105 = vunpack.c.l.bf16 %v48
  %v106 = vunpack.c.l.bf16 %v49
  %v107 = vunpack.c.l.bf16 %v50
  %v108 = vunpack.c.l.bf16 %v51
  %v109 = vunpack.c.l.bf16 %v52
  %v110 = vunpack.c.l.bf16 %v53
  %v111 = vunpack.c.l.bf16 %v54
  %v112 = vunpack.c.l.bf16 %v55
  %v113 = vunpack.c.l.bf16 %v56
  %v114 = vunpack.c.l.bf16 %v57
  %v115 = vunpack.c.l.bf16 %v58
  %v116 = vunpack.c.l.bf16 %v59
  %v117 = vunpack.c.l.bf16 %v60
  %v118 = vunpack.c.l.bf16 %v61
  %v119 = vunpack.c.l.bf16 %v62
  %v120 = vunpack.c.l.bf16 %v63
  %v121 = vunpack.c.l.bf16 %v64
  %v122 = vunpack.c.l.bf16 %v65
  %v123 = vunpack.c.l.bf16 %v66
  %v124 = vunpack.c.l.bf16 %v67
  %v125 = vunpack.c.l.bf16 %v68
  %v126 = vunpack.c.l.bf16 %v69
  %v127 = vunpack.c.l.bf16 %v70
  %v128 = vunpack.c.l.bf16 %v71
  %v129 = vunpack.c.l.bf16 %v72
  %v130 = vunpack.c.l.bf16 %v73
  %v131 = vunpack.c.l.bf16 %v74
  %v132 = vunpack.c.l.bf16 %v75
  %v133 = vunpack.c.l.bf16 %v76
  %v134 = vunpack.c.l.bf16 %v77
  %v135 = vld [vmem:[%s3] sm:$0x1]
  %v137 = vlaneseq
  %v138 = vshrl.u32 %v137, 7
  %v139 = vsub.s32 0, %v138
  %v140 = vrot.slane %v135, %v139
  %v142 = vmul.f32 %v78, %v140
  %v143 = vmul.f32 %v79, %v140
  %v144 = vmul.f32 %v80, %v140
  %v145 = vmul.f32 %v81, %v140
  %v146 = vmul.f32 %v82, %v140
  %v147 = vmul.f32 %v83, %v140
  %v148 = vmul.f32 %v84, %v140
  %v149 = vmul.f32 %v85, %v140
  %v150 = vmul.f32 %v86, %v140
  %v151 = vmul.f32 %v87, %v140
  %v152 = vmul.f32 %v88, %v140
  %v153 = vmul.f32 %v89, %v140
  %v154 = vmul.f32 %v90, %v140
  %v155 = vmul.f32 %v91, %v140
  %v156 = vmul.f32 %v92, %v140
  %v157 = vmul.f32 %v93, %v140
  %v158 = vmul.f32 %v94, %v140
  %v159 = vmul.f32 %v95, %v140
  %v160 = vmul.f32 %v96, %v140
  %v161 = vmul.f32 %v97, %v140
  %v162 = vmul.f32 %v98, %v140
  %v163 = vmul.f32 %v99, %v140
  %v164 = vmul.f32 %v100, %v140
  %v165 = vmul.f32 %v101, %v140
  %v166 = vmul.f32 %v102, %v140
  %v167 = vmul.f32 %v103, %v140
  %v168 = vmul.f32 %v104, %v140
  %v169 = vmul.f32 %v105, %v140
  %v170 = vmul.f32 %v106, %v140
  %v171 = vmul.f32 %v107, %v140
  %v172 = vmul.f32 %v108, %v140
  %v173 = vmul.f32 %v109, %v140
  %v174 = vmul.f32 %v110, %v140
  %v175 = vmul.f32 %v111, %v140
  %v176 = vmul.f32 %v112, %v140
  %v177 = vmul.f32 %v113, %v140
  %v178 = vmul.f32 %v114, %v140
  %v179 = vmul.f32 %v115, %v140
  %v180 = vmul.f32 %v116, %v140
  %v181 = vmul.f32 %v117, %v140
  %v182 = vmul.f32 %v118, %v140
  %v183 = vmul.f32 %v119, %v140
  %v184 = vmul.f32 %v120, %v140
  %v185 = vmul.f32 %v121, %v140
  %v186 = vmul.f32 %v122, %v140
  %v187 = vmul.f32 %v123, %v140
  %v188 = vmul.f32 %v124, %v140
  %v189 = vmul.f32 %v125, %v140
  %v190 = vmul.f32 %v126, %v140
  %v191 = vmul.f32 %v127, %v140
  %v192 = vmul.f32 %v128, %v140
  %v193 = vmul.f32 %v129, %v140
  %v194 = vmul.f32 %v130, %v140
  %v195 = vmul.f32 %v131, %v140
  %v196 = vmul.f32 %v132, %v140
  %v197 = vmul.f32 %v133, %v140
  %v198 = vmul.f32 %v134, %v140
  %v199 = vld [vmem:[%s4] sm:$0x1]
  %v201 = vlaneseq
  %v202 = vshrl.u32 %v201, 7
  %v203 = vsub.s32 0, %v202
  %v204 = vrot.slane %v199, %v203
  %v206 = vadd.f32 %v142, %v204
  %v207 = vadd.f32 %v143, %v204
  %v208 = vadd.f32 %v144, %v204
  %v209 = vadd.f32 %v145, %v204
  %v210 = vadd.f32 %v146, %v204
  %v211 = vadd.f32 %v147, %v204
  %v212 = vadd.f32 %v148, %v204
  %v213 = vadd.f32 %v149, %v204
  %v214 = vadd.f32 %v150, %v204
  %v215 = vadd.f32 %v151, %v204
  %v216 = vadd.f32 %v152, %v204
  %v217 = vadd.f32 %v153, %v204
  %v218 = vadd.f32 %v154, %v204
  %v219 = vadd.f32 %v155, %v204
  %v220 = vadd.f32 %v156, %v204
  %v221 = vadd.f32 %v157, %v204
  %v222 = vadd.f32 %v158, %v204
  %v223 = vadd.f32 %v159, %v204
  %v224 = vadd.f32 %v160, %v204
  %v225 = vadd.f32 %v161, %v204
  %v226 = vadd.f32 %v162, %v204
  %v227 = vadd.f32 %v163, %v204
  %v228 = vadd.f32 %v164, %v204
  %v229 = vadd.f32 %v165, %v204
  %v230 = vadd.f32 %v166, %v204
  %v231 = vadd.f32 %v167, %v204
  %v232 = vadd.f32 %v168, %v204
  %v233 = vadd.f32 %v169, %v204
  %v234 = vadd.f32 %v170, %v204
  %v235 = vadd.f32 %v171, %v204
  %v236 = vadd.f32 %v172, %v204
  %v237 = vadd.f32 %v173, %v204
  %v238 = vadd.f32 %v174, %v204
  %v239 = vadd.f32 %v175, %v204
  %v240 = vadd.f32 %v176, %v204
  %v241 = vadd.f32 %v177, %v204
  %v242 = vadd.f32 %v178, %v204
  %v243 = vadd.f32 %v179, %v204
  %v244 = vadd.f32 %v180, %v204
  %v245 = vadd.f32 %v181, %v204
  %v246 = vadd.f32 %v182, %v204
  %v247 = vadd.f32 %v183, %v204
  %v248 = vadd.f32 %v184, %v204
  %v249 = vadd.f32 %v185, %v204
  %v250 = vadd.f32 %v186, %v204
  %v251 = vadd.f32 %v187, %v204
  %v252 = vadd.f32 %v188, %v204
  %v253 = vadd.f32 %v189, %v204
  %v254 = vadd.f32 %v190, %v204
  %v255 = vadd.f32 %v191, %v204
  %v256 = vadd.f32 %v192, %v204
  %v257 = vadd.f32 %v193, %v204
  %v258 = vadd.f32 %v194, %v204
  %v259 = vadd.f32 %v195, %v204
  %v260 = vadd.f32 %v196, %v204
  %v261 = vadd.f32 %v197, %v204
  %v262 = vadd.f32 %v198, %v204
  %v263 = vpack.c.bf16 %v207, %v206
  %v264 = vpack.c.bf16 %v209, %v208
  %v265 = vpack.c.bf16 %v211, %v210
  %v266 = vpack.c.bf16 %v213, %v212
  %v267 = vpack.c.bf16 %v215, %v214
  %v268 = vpack.c.bf16 %v217, %v216
  %v269 = vpack.c.bf16 %v219, %v218
  %v270 = vpack.c.bf16 %v221, %v220
  %v271 = vpack.c.bf16 %v223, %v222
  %v272 = vpack.c.bf16 %v225, %v224
  %v273 = vpack.c.bf16 %v227, %v226
  %v274 = vpack.c.bf16 %v229, %v228
  %v275 = vpack.c.bf16 %v231, %v230
  %v276 = vpack.c.bf16 %v233, %v232
  %v277 = vpack.c.bf16 %v235, %v234
  %v278 = vpack.c.bf16 %v237, %v236
  %v279 = vpack.c.bf16 %v239, %v238
  %v280 = vpack.c.bf16 %v241, %v240
  %v281 = vpack.c.bf16 %v243, %v242
  %v282 = vpack.c.bf16 %v245, %v244
  %v283 = vpack.c.bf16 %v247, %v246
  %v284 = vpack.c.bf16 %v249, %v248
  %v285 = vpack.c.bf16 %v251, %v250
  %v286 = vpack.c.bf16 %v253, %v252
  %v287 = vpack.c.bf16 %v255, %v254
  %v288 = vpack.c.bf16 %v257, %v256
  %v289 = vpack.c.bf16 %v259, %v258
  %v290 = vpack.c.bf16 %v261, %v260
  %v291 = vpack.c.bf16 %v262, %v262
  %v292 = vld [vmem:[%s1] sm:$0xf]
  %v293 = vld [vmem:[%s1 + $0x4] sm:$0xf]
  %v294 = vld [vmem:[%s1 + $0x8] sm:$0xf]
  %v295 = vld [vmem:[%s1 + $0xc] sm:$0xf]
  %v296 = vld [vmem:[%s1 + $0x10] sm:$0xf]
  %v297 = vld [vmem:[%s1 + $0x14] sm:$0xf]
  %v298 = vld [vmem:[%s1 + $0x18] sm:$0xf]
  %v299 = vld [vmem:[%s1 + $0x1c] sm:$0xf]
  %v300 = vld [vmem:[%s2] sm:$0x1]
  %v302 = vlaneseq
  %v303 = vshrl.u32 %v302, 7
  %v304 = vsub.s32 0, %v303
  %v305 = vrot.slane %v300, %v304
  %v315 = vunpack.c.l.b16 %v292
  %v316 = vunpack.c.l.b16 %v293
  %v317 = vunpack.c.l.b16 %v294
  %v318 = vunpack.c.l.b16 %v295
  %v319 = vunpack.c.l.b16 %v296
  %v320 = vunpack.c.l.b16 %v297
  %v321 = vunpack.c.l.b16 %v298
  %v322 = vunpack.c.l.b16 %v299
  %v323 = vpack.c.b16 %v316, %v315
  %v324 = vpack.c.b16 %v318, %v317
  %v325 = vpack.c.b16 %v320, %v319
  %v326 = vpack.c.b16 %v322, %v321
  %vm331 = vcmask 523264
  %v333 = vsel %vm331, %v263, 0
  %v336 = vsel %vm331, %v264, 0
  %v339 = vsel %vm331, %v265, 0
  %v342 = vsel %vm331, %v266, 0
  %v345 = vsel %vm331, %v267, 0
  %v348 = vsel %vm331, %v268, 0
  %v351 = vsel %vm331, %v269, 0
  %v354 = vsel %vm331, %v270, 0
  %v357 = vsel %vm331, %v271, 0
  %v360 = vsel %vm331, %v272, 0
  %v363 = vsel %vm331, %v273, 0
  %v366 = vsel %vm331, %v274, 0
  %v369 = vsel %vm331, %v275, 0
  %v372 = vsel %vm331, %v276, 0
  %v375 = vsel %vm331, %v277, 0
  %v378 = vsel %vm331, %v278, 0
  %v381 = vsel %vm331, %v279, 0
  %v384 = vsel %vm331, %v280, 0
  %v387 = vsel %vm331, %v281, 0
  %v390 = vsel %vm331, %v282, 0
  %v393 = vsel %vm331, %v283, 0
  %v396 = vsel %vm331, %v284, 0
  %v399 = vsel %vm331, %v285, 0
  %v402 = vsel %vm331, %v286, 0
  %v405 = vsel %vm331, %v287, 0
  %v408 = vsel %vm331, %v288, 0
  %v411 = vsel %vm331, %v289, 0
  %v414 = vsel %vm331, %v290, 0
  %v417 = vsel %vm331, %v291, 0
  %419 = vmatprep.subr.bf16.mxu0 0
  %420 = vmatpush1.bf16.msra.mxu0 0
  %421 = vmatprep.subr.bf16.mxu0 0
  %422 = vmatpush1.bf16.msra.mxu0 0
  %423 = vmatprep.subr.bf16.mxu0 0
  %424 = vmatpush1.bf16.msra.mxu0 0
  %425 = vmatprep.subr.bf16.mxu0 0
  %426 = vmatpush1.bf16.msra.mxu0 0
  %427 = vmatprep.subr.bf16.mxu0 0
  %428 = vmatpush1.bf16.msra.mxu0 %v326
  %429 = vmatprep.subr.bf16.mxu0 0
  %430 = vmatpush1.bf16.msra.mxu0 %v325
  %431 = vmatprep.subr.bf16.mxu0 0
  %432 = vmatpush1.bf16.msra.mxu0 %v324
  %433 = vmatprep.subr.bf16.mxu0 0
  %434 = vmatpush1.bf16.msra.mxu0 %v323
  %435 = vmatprep.subr.bf16.mxu0 0
  %436 = vmatpush2.bf16.msra.mxu0 0
  %437 = vmatprep.subr.bf16.mxu0 0
  %438 = vmatpush2.bf16.msra.mxu0 0
  %439 = vmatprep.subr.bf16.mxu0 0
  %440 = vmatpush2.bf16.msra.mxu0 0
  %441 = vmatprep.subr.bf16.mxu0 0
  %442 = vmatpush2.bf16.msra.mxu0 0
  %443 = vmatprep.subr.bf16.mxu0 0
  %444 = vmatpush2.bf16.msra.mxu0 0
  %445 = vmatprep.subr.bf16.mxu0 0
  %446 = vmatpush2.bf16.msra.mxu0 0
  %447 = vmatprep.subr.bf16.mxu0 0
  %448 = vmatpush2.bf16.msra.mxu0 0
  %449 = vmatprep.subr.bf16.mxu0 0
  %450 = vmatpush2.bf16.msra.mxu0 0
  %451 = vmatprep.mubr.bf16.mxu0 0
  %452 = vmatmul.mubr.bf16.gmra.mxu0 %v333
  %v453 = vpop.f32.mrf.mxu0
  %v454 = vadd.f32 %v305, %v453
  %v455 = vpop.f32.mrf.mxu0
  %v456 = vpop.f32.mrf.mxu0
  %v457 = vadd.f32 %v305, %v456
  %v458 = vpop.f32.mrf.mxu0
  %459 = vmatprep.mubr.bf16.mxu0 0
  %460 = vmatmul.mubr.bf16.gmra.mxu0 %v336
  %v461 = vpop.f32.mrf.mxu0
  %v462 = vadd.f32 %v305, %v461
  %v463 = vpop.f32.mrf.mxu0
  %v464 = vpop.f32.mrf.mxu0
  %v465 = vadd.f32 %v305, %v464
  %v466 = vpop.f32.mrf.mxu0
  %467 = vmatprep.mubr.bf16.mxu0 0
  %468 = vmatmul.mubr.bf16.gmra.mxu0 %v339
  %v469 = vpop.f32.mrf.mxu0
  %v470 = vadd.f32 %v305, %v469
  %v471 = vpop.f32.mrf.mxu0
  %v472 = vpop.f32.mrf.mxu0
  %v473 = vadd.f32 %v305, %v472
  %v474 = vpop.f32.mrf.mxu0
  %475 = vmatprep.mubr.bf16.mxu0 0
  %476 = vmatmul.mubr.bf16.gmra.mxu0 %v342
  %v477 = vpop.f32.mrf.mxu0
  %v478 = vadd.f32 %v305, %v477
  %v479 = vpop.f32.mrf.mxu0
  %v480 = vpop.f32.mrf.mxu0
  %v481 = vadd.f32 %v305, %v480
  %v482 = vpop.f32.mrf.mxu0
  %483 = vmatprep.mubr.bf16.mxu0 0
  %484 = vmatmul.mubr.bf16.gmra.mxu0 %v345
  %v485 = vpop.f32.mrf.mxu0
  %v486 = vadd.f32 %v305, %v485
  %v487 = vpop.f32.mrf.mxu0
  %v488 = vpop.f32.mrf.mxu0
  %v489 = vadd.f32 %v305, %v488
  %v490 = vpop.f32.mrf.mxu0
  %491 = vmatprep.mubr.bf16.mxu0 0
  %492 = vmatmul.mubr.bf16.gmra.mxu0 %v348
  %v493 = vpop.f32.mrf.mxu0
  %v494 = vadd.f32 %v305, %v493
  %v495 = vpop.f32.mrf.mxu0
  %v496 = vpop.f32.mrf.mxu0
  %v497 = vadd.f32 %v305, %v496
  %v498 = vpop.f32.mrf.mxu0
  %499 = vmatprep.mubr.bf16.mxu0 0
  %500 = vmatmul.mubr.bf16.gmra.mxu0 %v351
  %v501 = vpop.f32.mrf.mxu0
  %v502 = vadd.f32 %v305, %v501
  %v503 = vpop.f32.mrf.mxu0
  %v504 = vpop.f32.mrf.mxu0
  %v505 = vadd.f32 %v305, %v504
  %v506 = vpop.f32.mrf.mxu0
  %507 = vmatprep.mubr.bf16.mxu0 0
  %508 = vmatmul.mubr.bf16.gmra.mxu0 %v354
  %v509 = vpop.f32.mrf.mxu0
  %v510 = vadd.f32 %v305, %v509
  %v511 = vpop.f32.mrf.mxu0
  %v512 = vpop.f32.mrf.mxu0
  %v513 = vadd.f32 %v305, %v512
  %v514 = vpop.f32.mrf.mxu0
  %515 = vmatprep.mubr.bf16.mxu0 0
  %516 = vmatmul.mubr.bf16.gmra.mxu0 %v357
  %v517 = vpop.f32.mrf.mxu0
  %v518 = vadd.f32 %v305, %v517
  %v519 = vpop.f32.mrf.mxu0
  %v520 = vpop.f32.mrf.mxu0
  %v521 = vadd.f32 %v305, %v520
  %v522 = vpop.f32.mrf.mxu0
  %523 = vmatprep.mubr.bf16.mxu0 0
  %524 = vmatmul.mubr.bf16.gmra.mxu0 %v360
  %v525 = vpop.f32.mrf.mxu0
  %v526 = vadd.f32 %v305, %v525
  %v527 = vpop.f32.mrf.mxu0
  %v528 = vpop.f32.mrf.mxu0
  %v529 = vadd.f32 %v305, %v528
  %v530 = vpop.f32.mrf.mxu0
  %531 = vmatprep.mubr.bf16.mxu0 0
  %532 = vmatmul.mubr.bf16.gmra.mxu0 %v363
  %v533 = vpop.f32.mrf.mxu0
  %v534 = vadd.f32 %v305, %v533
  %v535 = vpop.f32.mrf.mxu0
  %v536 = vpop.f32.mrf.mxu0
  %v537 = vadd.f32 %v305, %v536
  %v538 = vpop.f32.mrf.mxu0
  %539 = vmatprep.mubr.bf16.mxu0 0
  %540 = vmatmul.mubr.bf16.gmra.mxu0 %v366
  %v541 = vpop.f32.mrf.mxu0
  %v542 = vadd.f32 %v305, %v541
  %v543 = vpop.f32.mrf.mxu0
  %v544 = vpop.f32.mrf.mxu0
  %v545 = vadd.f32 %v305, %v544
  %v546 = vpop.f32.mrf.mxu0
  %547 = vmatprep.mubr.bf16.mxu0 0
  %548 = vmatmul.mubr.bf16.gmra.mxu0 %v369
  %v549 = vpop.f32.mrf.mxu0
  %v550 = vadd.f32 %v305, %v549
  %v551 = vpop.f32.mrf.mxu0
  %v552 = vpop.f32.mrf.mxu0
  %v553 = vadd.f32 %v305, %v552
  %v554 = vpop.f32.mrf.mxu0
  %555 = vmatprep.mubr.bf16.mxu0 0
  %556 = vmatmul.mubr.bf16.gmra.mxu0 %v372
  %v557 = vpop.f32.mrf.mxu0
  %v558 = vadd.f32 %v305, %v557
  %v559 = vpop.f32.mrf.mxu0
  %v560 = vpop.f32.mrf.mxu0
  %v561 = vadd.f32 %v305, %v560
  %v562 = vpop.f32.mrf.mxu0
  %563 = vmatprep.mubr.bf16.mxu0 0
  %564 = vmatmul.mubr.bf16.gmra.mxu0 %v375
  %v565 = vpop.f32.mrf.mxu0
  %v566 = vadd.f32 %v305, %v565
  %v567 = vpop.f32.mrf.mxu0
  %v568 = vpop.f32.mrf.mxu0
  %v569 = vadd.f32 %v305, %v568
  %v570 = vpop.f32.mrf.mxu0
  %571 = vmatprep.mubr.bf16.mxu0 0
  %572 = vmatmul.mubr.bf16.gmra.mxu0 %v378
  %v573 = vpop.f32.mrf.mxu0
  %v574 = vadd.f32 %v305, %v573
  %v575 = vpop.f32.mrf.mxu0
  %v576 = vpop.f32.mrf.mxu0
  %v577 = vadd.f32 %v305, %v576
  %v578 = vpop.f32.mrf.mxu0
  %579 = vmatprep.mubr.bf16.mxu0 0
  %580 = vmatmul.mubr.bf16.gmra.mxu0 %v381
  %v581 = vpop.f32.mrf.mxu0
  %v582 = vadd.f32 %v305, %v581
  %v583 = vpop.f32.mrf.mxu0
  %v584 = vpop.f32.mrf.mxu0
  %v585 = vadd.f32 %v305, %v584
  %v586 = vpop.f32.mrf.mxu0
  %587 = vmatprep.mubr.bf16.mxu0 0
  %588 = vmatmul.mubr.bf16.gmra.mxu0 %v384
  %v589 = vpop.f32.mrf.mxu0
  %v590 = vadd.f32 %v305, %v589
  %v591 = vpop.f32.mrf.mxu0
  %v592 = vpop.f32.mrf.mxu0
  %v593 = vadd.f32 %v305, %v592
  %v594 = vpop.f32.mrf.mxu0
  %595 = vmatprep.mubr.bf16.mxu0 0
  %596 = vmatmul.mubr.bf16.gmra.mxu0 %v387
  %v597 = vpop.f32.mrf.mxu0
  %v598 = vadd.f32 %v305, %v597
  %v599 = vpop.f32.mrf.mxu0
  %v600 = vpop.f32.mrf.mxu0
  %v601 = vadd.f32 %v305, %v600
  %v602 = vpop.f32.mrf.mxu0
  %603 = vmatprep.mubr.bf16.mxu0 0
  %604 = vmatmul.mubr.bf16.gmra.mxu0 %v390
  %v605 = vpop.f32.mrf.mxu0
  %v606 = vadd.f32 %v305, %v605
  %v607 = vpop.f32.mrf.mxu0
  %v608 = vpop.f32.mrf.mxu0
  %v609 = vadd.f32 %v305, %v608
  %v610 = vpop.f32.mrf.mxu0
  %611 = vmatprep.mubr.bf16.mxu0 0
  %612 = vmatmul.mubr.bf16.gmra.mxu0 %v393
  %v613 = vpop.f32.mrf.mxu0
  %v614 = vadd.f32 %v305, %v613
  %v615 = vpop.f32.mrf.mxu0
  %v616 = vpop.f32.mrf.mxu0
  %v617 = vadd.f32 %v305, %v616
  %v618 = vpop.f32.mrf.mxu0
  %619 = vmatprep.mubr.bf16.mxu0 0
  %620 = vmatmul.mubr.bf16.gmra.mxu0 %v396
  %v621 = vpop.f32.mrf.mxu0
  %v622 = vadd.f32 %v305, %v621
  %v623 = vpop.f32.mrf.mxu0
  %v624 = vpop.f32.mrf.mxu0
  %v625 = vadd.f32 %v305, %v624
  %v626 = vpop.f32.mrf.mxu0
  %627 = vmatprep.mubr.bf16.mxu0 0
  %628 = vmatmul.mubr.bf16.gmra.mxu0 %v399
  %v629 = vpop.f32.mrf.mxu0
  %v630 = vadd.f32 %v305, %v629
  %v631 = vpop.f32.mrf.mxu0
  %v632 = vpop.f32.mrf.mxu0
  %v633 = vadd.f32 %v305, %v632
  %v634 = vpop.f32.mrf.mxu0
  %635 = vmatprep.mubr.bf16.mxu0 0
  %636 = vmatmul.mubr.bf16.gmra.mxu0 %v402
  %v637 = vpop.f32.mrf.mxu0
  %v638 = vadd.f32 %v305, %v637
  %v639 = vpop.f32.mrf.mxu0
  %v640 = vpop.f32.mrf.mxu0
  %v641 = vadd.f32 %v305, %v640
  %v642 = vpop.f32.mrf.mxu0
  %643 = vmatprep.mubr.bf16.mxu0 0
  %644 = vmatmul.mubr.bf16.gmra.mxu0 %v405
  %v645 = vpop.f32.mrf.mxu0
  %v646 = vadd.f32 %v305, %v645
  %v647 = vpop.f32.mrf.mxu0
  %v648 = vpop.f32.mrf.mxu0
  %v649 = vadd.f32 %v305, %v648
  %v650 = vpop.f32.mrf.mxu0
  %651 = vmatprep.mubr.bf16.mxu0 0
  %652 = vmatmul.mubr.bf16.gmra.mxu0 %v408
  %v653 = vpop.f32.mrf.mxu0
  %v654 = vadd.f32 %v305, %v653
  %v655 = vpop.f32.mrf.mxu0
  %v656 = vpop.f32.mrf.mxu0
  %v657 = vadd.f32 %v305, %v656
  %v658 = vpop.f32.mrf.mxu0
  %659 = vmatprep.mubr.bf16.mxu0 0
  %660 = vmatmul.mubr.bf16.gmra.mxu0 %v411
  %v661 = vpop.f32.mrf.mxu0
  %v662 = vadd.f32 %v305, %v661
  %v663 = vpop.f32.mrf.mxu0
  %v664 = vpop.f32.mrf.mxu0
  %v665 = vadd.f32 %v305, %v664
  %v666 = vpop.f32.mrf.mxu0
  %667 = vmatprep.mubr.bf16.mxu0 0
  %668 = vmatmul.mubr.bf16.gmra.mxu0 %v414
  %v669 = vpop.f32.mrf.mxu0
  %v670 = vadd.f32 %v305, %v669
  %v671 = vpop.f32.mrf.mxu0
  %v672 = vpop.f32.mrf.mxu0
  %v673 = vadd.f32 %v305, %v672
  %v674 = vpop.f32.mrf.mxu0
  %675 = vmatprep.mubr.bf16.mxu0 0
  %676 = vmatmul.mubr.bf16.gmra.mxu0 %v417
  %v677 = vpop.f32.mrf.mxu0
  %v678 = vadd.f32 %v305, %v677
  %v679 = vpop.f32.mrf.mxu0
  %v680 = vpop.f32.mrf.mxu0
  %v681 = vpop.f32.mrf.mxu0
  %682 = vdwg.mxu0
  %v683 = vpack.c.bf16 %v457, %v454
  %v684 = vpack.c.bf16 %v465, %v462
  %v685 = vpack.c.bf16 %v473, %v470
  %v686 = vpack.c.bf16 %v481, %v478
  %v687 = vpack.c.bf16 %v489, %v486
  %v688 = vpack.c.bf16 %v497, %v494
  %v689 = vpack.c.bf16 %v505, %v502
  %v690 = vpack.c.bf16 %v513, %v510
  %v691 = vpack.c.bf16 %v521, %v518
  %v692 = vpack.c.bf16 %v529, %v526
  %v693 = vpack.c.bf16 %v537, %v534
  %v694 = vpack.c.bf16 %v545, %v542
  %v695 = vpack.c.bf16 %v553, %v550
  %v696 = vpack.c.bf16 %v561, %v558
  %v697 = vpack.c.bf16 %v569, %v566
  %v698 = vpack.c.bf16 %v577, %v574
  %v699 = vpack.c.bf16 %v585, %v582
  %v700 = vpack.c.bf16 %v593, %v590
  %v701 = vpack.c.bf16 %v601, %v598
  %v702 = vpack.c.bf16 %v609, %v606
  %v703 = vpack.c.bf16 %v617, %v614
  %v704 = vpack.c.bf16 %v625, %v622
  %v705 = vpack.c.bf16 %v633, %v630
  %v706 = vpack.c.bf16 %v641, %v638
  %v707 = vpack.c.bf16 %v649, %v646
  %v708 = vpack.c.bf16 %v657, %v654
  %v709 = vpack.c.bf16 %v665, %v662
  %v710 = vpack.c.bf16 %v673, %v670
  %v711 = vpack.c.bf16 %v678, %v678
  %v741 = vunpack.c.l.b16 %v683
  %v742 = vunpack.c.h.b16 %v683
  %v743 = vunpack.c.l.b16 %v684
  %v744 = vunpack.c.h.b16 %v684
  %v745 = vunpack.c.l.b16 %v685
  %v746 = vunpack.c.h.b16 %v685
  %v747 = vunpack.c.l.b16 %v686
  %v748 = vunpack.c.h.b16 %v686
  %v749 = vunpack.c.l.b16 %v687
  %v750 = vunpack.c.h.b16 %v687
  %v751 = vunpack.c.l.b16 %v688
  %v752 = vunpack.c.h.b16 %v688
  %v753 = vunpack.c.l.b16 %v689
  %v754 = vunpack.c.h.b16 %v689
  %v755 = vunpack.c.l.b16 %v690
  %v756 = vunpack.c.h.b16 %v690
  %v757 = vunpack.c.l.b16 %v691
  %v758 = vunpack.c.h.b16 %v691
  %v759 = vunpack.c.l.b16 %v692
  %v760 = vunpack.c.h.b16 %v692
  %v761 = vunpack.c.l.b16 %v693
  %v762 = vunpack.c.h.b16 %v693
  %v763 = vunpack.c.l.b16 %v694
  %v764 = vunpack.c.h.b16 %v694
  %v765 = vunpack.c.l.b16 %v695
  %v766 = vunpack.c.h.b16 %v695
  %v767 = vunpack.c.l.b16 %v696
  %v768 = vunpack.c.h.b16 %v696
  %v769 = vunpack.c.l.b16 %v697
  %v770 = vunpack.c.h.b16 %v697
  %v771 = vunpack.c.l.b16 %v698
  %v772 = vunpack.c.h.b16 %v698
  %v773 = vunpack.c.l.b16 %v699
  %v774 = vunpack.c.h.b16 %v699
  %v775 = vunpack.c.l.b16 %v700
  %v776 = vunpack.c.h.b16 %v700
  %v777 = vunpack.c.l.b16 %v701
  %v778 = vunpack.c.h.b16 %v701
  %v779 = vunpack.c.l.b16 %v702
  %v780 = vunpack.c.h.b16 %v702
  %v781 = vunpack.c.l.b16 %v703
  %v782 = vunpack.c.h.b16 %v703
  %v783 = vunpack.c.l.b16 %v704
  %v784 = vunpack.c.h.b16 %v704
  %v785 = vunpack.c.l.b16 %v705
  %v786 = vunpack.c.h.b16 %v705
  %v787 = vunpack.c.l.b16 %v706
  %v788 = vunpack.c.h.b16 %v706
  %v789 = vunpack.c.l.b16 %v707
  %v790 = vunpack.c.h.b16 %v707
  %v791 = vunpack.c.l.b16 %v708
  %v792 = vunpack.c.h.b16 %v708
  %v793 = vunpack.c.l.b16 %v709
  %v794 = vunpack.c.h.b16 %v709
  %v795 = vunpack.c.l.b16 %v710
  %v796 = vunpack.c.h.b16 %v710
  %v797 = vunpack.c.l.b16 %v711
  %v798 = vpack.c.b16 %v741, %v741
  %v799 = vpack.c.b16 %v742, %v742
  %v800 = vpack.c.b16 %v743, %v743
  %v801 = vpack.c.b16 %v744, %v744
  %v802 = vpack.c.b16 %v745, %v745
  %v803 = vpack.c.b16 %v746, %v746
  %v804 = vpack.c.b16 %v747, %v747
  %v805 = vpack.c.b16 %v748, %v748
  %v806 = vpack.c.b16 %v749, %v749
  %v807 = vpack.c.b16 %v750, %v750
  %v808 = vpack.c.b16 %v751, %v751
  %v809 = vpack.c.b16 %v752, %v752
  %v810 = vpack.c.b16 %v753, %v753
  %v811 = vpack.c.b16 %v754, %v754
  %v812 = vpack.c.b16 %v755, %v755
  %v813 = vpack.c.b16 %v756, %v756
  %v814 = vpack.c.b16 %v757, %v757
  %v815 = vpack.c.b16 %v758, %v758
  %v816 = vpack.c.b16 %v759, %v759
  %v817 = vpack.c.b16 %v760, %v760
  %v818 = vpack.c.b16 %v761, %v761
  %v819 = vpack.c.b16 %v762, %v762
  %v820 = vpack.c.b16 %v763, %v763
  %v821 = vpack.c.b16 %v764, %v764
  %v822 = vpack.c.b16 %v765, %v765
  %v823 = vpack.c.b16 %v766, %v766
  %v824 = vpack.c.b16 %v767, %v767
  %v825 = vpack.c.b16 %v768, %v768
  %v826 = vpack.c.b16 %v769, %v769
  %v827 = vpack.c.b16 %v770, %v770
  %v828 = vpack.c.b16 %v771, %v771
  %v829 = vpack.c.b16 %v772, %v772
  %v830 = vpack.c.b16 %v773, %v773
  %v831 = vpack.c.b16 %v774, %v774
  %v832 = vpack.c.b16 %v775, %v775
  %v833 = vpack.c.b16 %v776, %v776
  %v834 = vpack.c.b16 %v777, %v777
  %v835 = vpack.c.b16 %v778, %v778
  %v836 = vpack.c.b16 %v779, %v779
  %v837 = vpack.c.b16 %v780, %v780
  %v838 = vpack.c.b16 %v781, %v781
  %v839 = vpack.c.b16 %v782, %v782
  %v840 = vpack.c.b16 %v783, %v783
  %v841 = vpack.c.b16 %v784, %v784
  %v842 = vpack.c.b16 %v785, %v785
  %v843 = vpack.c.b16 %v786, %v786
  %v844 = vpack.c.b16 %v787, %v787
  %v845 = vpack.c.b16 %v788, %v788
  %v846 = vpack.c.b16 %v789, %v789
  %v847 = vpack.c.b16 %v790, %v790
  %v848 = vpack.c.b16 %v791, %v791
  %v849 = vpack.c.b16 %v792, %v792
  %v850 = vpack.c.b16 %v793, %v793
  %v851 = vpack.c.b16 %v794, %v794
  %v852 = vpack.c.b16 %v795, %v795
  %v853 = vpack.c.b16 %v796, %v796
  %v854 = vpack.c.b16 %v797, %v797
  %vm912 = vcmask 60416
  %913 = vst.msk [vmem:[%s5] sm:$0xf] %vm912, %v798
  %914 = vst.msk [vmem:[%s5 + $0x4] sm:$0xf] %vm912, %v799
  %915 = vst.msk [vmem:[%s5 + $0x8] sm:$0xf] %vm912, %v800
  %916 = vst.msk [vmem:[%s5 + $0xc] sm:$0xf] %vm912, %v801
  %917 = vst.msk [vmem:[%s5 + $0x10] sm:$0xf] %vm912, %v802
  %918 = vst.msk [vmem:[%s5 + $0x14] sm:$0xf] %vm912, %v803
  %919 = vst.msk [vmem:[%s5 + $0x18] sm:$0xf] %vm912, %v804
  %920 = vst.msk [vmem:[%s5 + $0x1c] sm:$0xf] %vm912, %v805
  %921 = vst.msk [vmem:[%s5 + $0x20] sm:$0xf] %vm912, %v806
  %922 = vst.msk [vmem:[%s5 + $0x24] sm:$0xf] %vm912, %v807
  %923 = vst.msk [vmem:[%s5 + $0x28] sm:$0xf] %vm912, %v808
  %924 = vst.msk [vmem:[%s5 + $0x2c] sm:$0xf] %vm912, %v809
  %925 = vst.msk [vmem:[%s5 + $0x30] sm:$0xf] %vm912, %v810
  %926 = vst.msk [vmem:[%s5 + $0x34] sm:$0xf] %vm912, %v811
  %927 = vst.msk [vmem:[%s5 + $0x38] sm:$0xf] %vm912, %v812
  %928 = vst.msk [vmem:[%s5 + $0x3c] sm:$0xf] %vm912, %v813
  %929 = vst.msk [vmem:[%s5 + $0x40] sm:$0xf] %vm912, %v814
  %930 = vst.msk [vmem:[%s5 + $0x44] sm:$0xf] %vm912, %v815
  %931 = vst.msk [vmem:[%s5 + $0x48] sm:$0xf] %vm912, %v816
  %932 = vst.msk [vmem:[%s5 + $0x4c] sm:$0xf] %vm912, %v817
  %933 = vst.msk [vmem:[%s5 + $0x50] sm:$0xf] %vm912, %v818
  %934 = vst.msk [vmem:[%s5 + $0x54] sm:$0xf] %vm912, %v819
  %935 = vst.msk [vmem:[%s5 + $0x58] sm:$0xf] %vm912, %v820
  %936 = vst.msk [vmem:[%s5 + $0x5c] sm:$0xf] %vm912, %v821
  %937 = vst.msk [vmem:[%s5 + $0x60] sm:$0xf] %vm912, %v822
  %938 = vst.msk [vmem:[%s5 + $0x64] sm:$0xf] %vm912, %v823
  %939 = vst.msk [vmem:[%s5 + $0x68] sm:$0xf] %vm912, %v824
  %940 = vst.msk [vmem:[%s5 + $0x6c] sm:$0xf] %vm912, %v825
  %941 = vst.msk [vmem:[%s5 + $0x70] sm:$0xf] %vm912, %v826
  %942 = vst.msk [vmem:[%s5 + $0x74] sm:$0xf] %vm912, %v827
  %943 = vst.msk [vmem:[%s5 + $0x78] sm:$0xf] %vm912, %v828
  %944 = vst.msk [vmem:[%s5 + $0x7c] sm:$0xf] %vm912, %v829
  %945 = vst.msk [vmem:[%s5 + $0x80] sm:$0xf] %vm912, %v830
  %946 = vst.msk [vmem:[%s5 + $0x84] sm:$0xf] %vm912, %v831
  %947 = vst.msk [vmem:[%s5 + $0x88] sm:$0xf] %vm912, %v832
  %948 = vst.msk [vmem:[%s5 + $0x8c] sm:$0xf] %vm912, %v833
  %949 = vst.msk [vmem:[%s5 + $0x90] sm:$0xf] %vm912, %v834
  %950 = vst.msk [vmem:[%s5 + $0x94] sm:$0xf] %vm912, %v835
  %951 = vst.msk [vmem:[%s5 + $0x98] sm:$0xf] %vm912, %v836
  %952 = vst.msk [vmem:[%s5 + $0x9c] sm:$0xf] %vm912, %v837
  %953 = vst.msk [vmem:[%s5 + $0xa0] sm:$0xf] %vm912, %v838
  %954 = vst.msk [vmem:[%s5 + $0xa4] sm:$0xf] %vm912, %v839
  %955 = vst.msk [vmem:[%s5 + $0xa8] sm:$0xf] %vm912, %v840
  %956 = vst.msk [vmem:[%s5 + $0xac] sm:$0xf] %vm912, %v841
  %957 = vst.msk [vmem:[%s5 + $0xb0] sm:$0xf] %vm912, %v842
  %958 = vst.msk [vmem:[%s5 + $0xb4] sm:$0xf] %vm912, %v843
  %959 = vst.msk [vmem:[%s5 + $0xb8] sm:$0xf] %vm912, %v844
  %960 = vst.msk [vmem:[%s5 + $0xbc] sm:$0xf] %vm912, %v845
  %961 = vst.msk [vmem:[%s5 + $0xc0] sm:$0xf] %vm912, %v846
  %962 = vst.msk [vmem:[%s5 + $0xc4] sm:$0xf] %vm912, %v847
  %963 = vst.msk [vmem:[%s5 + $0xc8] sm:$0xf] %vm912, %v848
  %964 = vst.msk [vmem:[%s5 + $0xcc] sm:$0xf] %vm912, %v849
  %965 = vst.msk [vmem:[%s5 + $0xd0] sm:$0xf] %vm912, %v850
  %966 = vst.msk [vmem:[%s5 + $0xd4] sm:$0xf] %vm912, %v851
  %967 = vst.msk [vmem:[%s5 + $0xd8] sm:$0xf] %vm912, %v852
  %968 = vst.msk [vmem:[%s5 + $0xdc] sm:$0xf] %vm912, %v853
  %vm969 = vcmask 57344
  %970 = vst.msk [vmem:[%s5 + $0xe0] sm:$0x1] %vm969, %v854
  // Predicated region
  $region22: #{tpu_custom_call.1} parent=0 // pred_check
    _
  $region23: #{tpu_custom_call.1} parent=0 // pred_check_branch
    %972 = sbr.rel (0) target = $region25
  $region24: #{tpu_custom_call.1} parent=0 // pred_region
    _
  $region25: #{tpu_custom_call.1} parent=0 // pred_fallthru
    _
  // Predicated region
  $region26: #{tpu_custom_call.1} parent=0 // pred_check
    _
  $region27: #{tpu_custom_call.1} parent=0 // pred_check_branch
    %974 = sbr.rel (0) target = $region29
  $region28: #{tpu_custom_call.1} parent=0 // pred_region
    _
  $region29: #{tpu_custom_call.1} parent=0 // pred_fallthru
    _

</llo_original>
